<compile_context>
chip_gen: v7x
topology: tpu7x:2x2x1
jax: 0.10.0
libtpu: 0.0.40
codegen_flags: <defaults>
</compile_context>

<pallas_src>
import jax
import jax.numpy as jnp
from jax.experimental import pallas as pl
from jax.experimental.pallas import tpu as pltpu


def _round_up(x, m):
    return (x + m - 1) // m * m


def _vmem_capacity_bytes():
    """Per-core VMEM capacity (128 MiB v5e/v6e, 64 MiB v7x); safe fallback."""
    try:
        return int(pltpu.get_tpu_info().vmem_capacity_bytes)
    except Exception:
        return 64 * 1024 * 1024  # conservative: v7x per-TensorCore size


# ---------------------------------------------------------------------------
# Path A: table resident in VMEM -> one-hot MXU gather
# ---------------------------------------------------------------------------
def _embed_onehot_kernel(ids_ref, table_ref, out_ref):
    # ids_ref   : (T, 1) int32   token ids for this block (sublane-oriented)
    # table_ref : (V, D)         full embedding table, resident in VMEM
    # out_ref   : (T, D)         dense output tile (lane-dense store)
    tok = ids_ref[...]                                        # (T, 1)
    t_blk = out_ref.shape[0]
    vocab = table_ref.shape[0]
    col = jax.lax.broadcasted_iota(jnp.int32, (t_blk, vocab), 1)
    one_hot = (tok == col).astype(table_ref.dtype)            # exact 0/1
    out_ref[...] = jnp.dot(
        one_hot, table_ref[...], preferred_element_type=jnp.float32
    ).astype(out_ref.dtype)


def _resident_table_spec(vocab, d_model):
    # Block index never changes -> double-buffering the table only wastes VMEM.
    try:
        return pl.BlockSpec((vocab, d_model), lambda i: (0, 0),
                            pipeline_mode=pl.Buffered(1))
    except Exception:
        return pl.BlockSpec((vocab, d_model), lambda i: (0, 0))


def _embed_small_table(flat_ids, table, *, max_block_tokens=512,
                       onehot_budget_bytes=8 << 20):
    vocab, d_model = table.shape
    n_tok = flat_ids.shape[0]
    itemsize = table.dtype.itemsize

    # Token block: as large as possible (amortize grid-step overhead, fill the
    # MXU M dim), capped so the (T, V) f32 one-hot stays within budget.
    onehot_cap = max(8, (onehot_budget_bytes // (vocab * 4)) // 8 * 8)
    t_blk = min(max_block_tokens, onehot_cap, _round_up(n_tok, 8))
    if _round_up(n_tok, t_blk) // t_blk < 2 and t_blk > 8:
        # Keep >= 2 grid blocks so both TensorCores get work on v7x.
        t_blk = max(8, _round_up(t_blk // 2, 8))

    n_pad = _round_up(n_tok, t_blk)
    n_blocks = n_pad // t_blk
    ids_col = jnp.pad(flat_ids, (0, n_pad - n_tok)).reshape(n_pad, 1)

    # Scoped-VMEM limit: default is only 16/32 MiB on v5e/v6e. Budget assumes
    # worst case (2x table if single-buffering were ignored) + 2x output tile
    # + one-hot intermediate + slack, capped at physical capacity.
    table_bytes = vocab * d_model * itemsize
    need = (2 * table_bytes
            + 2 * t_blk * d_model * itemsize
            + 2 * t_blk * vocab * 4
            + (4 << 20))
    vmem_limit = int(min(max(need, 32 << 20), _vmem_capacity_bytes()))

    return pl.pallas_call(
        _embed_onehot_kernel,
        out_shape=jax.ShapeDtypeStruct((n_pad, d_model), table.dtype),
        grid=(n_blocks,),
        in_specs=[
            pl.BlockSpec((t_blk, 1), lambda i: (i, 0)),      # token-id block
            _resident_table_spec(vocab, d_model),            # resident table
        ],
        out_specs=pl.BlockSpec((t_blk, d_model), lambda i: (i, 0)),
        compiler_params=pltpu.CompilerParams(
            dimension_semantics=("parallel",),
            vmem_limit_bytes=vmem_limit,
        ),
    )(ids_col, table)


# ---------------------------------------------------------------------------
# Path B: large-vocab fallback -> overlapped per-row DMA gather into out block
# ---------------------------------------------------------------------------
def _embed_dma_kernel(ids_smem, table_hbm, out_ref, copy_sems):
    # ids_smem  : (n_pad,) int32 in SMEM (scalar prefetch)
    # table_hbm : (V, D) in HBM (memory_space=pl.ANY)
    # out_ref   : (T, D) pipelined VMEM output tile -- DMA rows straight in
    # copy_sems : (T,) DMA semaphores
    t_blk = out_ref.shape[0]
    base = pl.program_id(0) * t_blk

    copies = []
    for t in range(t_blk):               # static unroll: T DMAs all in flight
        tok = ids_smem[base + t]
        cp = pltpu.make_async_copy(
            table_hbm.at[pl.ds(tok, 1), :],
            out_ref.at[pl.ds(t, 1), :],
            copy_sems.at[t],
        )
        cp.start()
        copies.append(cp)
    for cp in copies:                     # all started before any wait
        cp.wait()


def _embed_dma_gather(flat_ids, table, *, tokens_per_block=64):
    # TODO(synk): for very long sequences (100K+ tokens) the full ids array is
    # scalar-prefetched into SMEM; switch to a per-block SMEM id tile (and a
    # rolling DMA window if tokens_per_block is raised past ~64) to bound SMEM.
    vocab, d_model = table.shape
    n_tok = flat_ids.shape[0]

    t_blk = min(tokens_per_block, _round_up(n_tok, 8))
    if _round_up(n_tok, t_blk) // t_blk < 2 and t_blk > 8:
        t_blk = max(8, _round_up(t_blk // 2, 8))     # keep >= 2 blocks (v7x)
    n_pad = _round_up(n_tok, t_blk)
    n_blocks = n_pad // t_blk
    ids_pad = jnp.pad(flat_ids, (0, n_pad - n_tok))

    return pl.pallas_call(
        _embed_dma_kernel,
        out_shape=jax.ShapeDtypeStruct((n_pad, d_model), table.dtype),
        grid_spec=pltpu.PrefetchScalarGridSpec(
            num_scalar_prefetch=1,                         # ids -> SMEM
            grid=(n_blocks,),
            in_specs=[pl.BlockSpec(memory_space=pl.ANY)],  # table stays in HBM
            out_specs=pl.BlockSpec((t_blk, d_model), lambda i, ids_sref: (i, 0)),
            scratch_shapes=[pltpu.SemaphoreType.DMA((t_blk,))],
        ),
        compiler_params=pltpu.CompilerParams(
            dimension_semantics=("parallel",),
        ),
    )(ids_pad, table)


# ---------------------------------------------------------------------------
# Public wrapper (Embedder.forward equivalent)
# ---------------------------------------------------------------------------
def embedder_forward(ids, table, *, vmem_table_budget_bytes=None,
                     max_onehot_vocab=8192, force_dma_gather=False):
    """Pallas equivalent of nn.Embedding(vocab_size, d_model)(ids)."""
    ids = jnp.asarray(ids).astype(jnp.int32)
    table = jnp.asarray(table)
    orig_shape = ids.shape
    vocab, d_model = table.shape

    # PyTorch raises on out-of-range ids; we clamp instead (no runtime check
    # is possible inside the kernel's data-dependent gather).
    flat_ids = jnp.clip(ids.reshape(-1), 0, vocab - 1)
    n_tok = flat_ids.shape[0]

    if vmem_table_budget_bytes is None:
        # Per-generation default: 3/8 of per-core VMEM
        # (v5e/v6e: 48 MiB of 128; v7x: 24 MiB of 64 — each TC holds a copy).
        vmem_table_budget_bytes = (_vmem_capacity_bytes() * 3) // 8

    table_bytes = vocab * d_model * table.dtype.itemsize
    use_resident = (
        (not force_dma_gather)
        and vocab <= max_onehot_vocab                 # one-hot cost scales w/ V
        and table_bytes <= vmem_table_budget_bytes
    )
    if use_resident:
        out = _embed_small_table(flat_ids, table)
    else:
        out = _embed_dma_gather(flat_ids, table)

    return out[:n_tok].reshape(orig_shape + (d_model,))


if __name__ == "__main__":
    vocab_size = 256
    d_model = 128
    batch, seq = 2, 8

    key = jax.random.PRNGKey(0)
    k_tab, k_ids = jax.random.split(key)

    # nn.Embedding default init: weights ~ N(0, 1)
    table = jax.random.normal(k_tab, (vocab_size, d_model), dtype=jnp.float32)
    ids = jax.random.randint(k_ids, (batch, seq), 0, vocab_size, dtype=jnp.int32)

    ref = jnp.take(table, ids, axis=0)

    # Path A (auto-dispatch: 128 KiB table -> VMEM-resident one-hot MXU gather)
    out = embedder_forward(ids, table)
    out = jax.block_until_ready(out)
    assert out.shape == (batch, seq, d_model)
    assert jnp.allclose(out, ref), "resident-table path mismatch"

    # Path B (large-vocab fallback: overlapped row-DMA gather into the output
    # block), forced here so both code paths are exercised on-device.
    out_dma = embedder_forward(ids, table, force_dma_gather=True)
    out_dma = jax.block_until_ready(out_dma)
    assert jnp.array_equal(out_dma, ref), "DMA-gather path mismatch"

    print("KERNEL_OK")
</pallas_src>

<mosaic_0001>
module attributes {stable_mosaic.version = 11 : i64} {
  func.func @_embed_onehot_kernel(%arg0: i32, %arg1: memref<8x1xi32, #tpu.memory_space<vmem>>, %arg2: memref<256x128xf32, #tpu.memory_space<vmem>>, %arg3: memref<8x128xf32, #tpu.memory_space<vmem>>) attributes {dimension_semantics = [#tpu.dimension_semantics<parallel>], iteration_bounds = array<i64: 2>, scalar_prefetch = 0 : i64, scratch_operands = 0 : i64, tpu.core_type = #tpu.core_type<tc>, window_params = [{transform_indices = @transform_0, window_bounds = array<i64: 8, 1>}, {pipeline_mode = #tpu.pipeline_mode<synchronous>, transform_indices = @transform_1, window_bounds = array<i64: 256, 128>}, {transform_indices = @transform_2, window_bounds = array<i64: 8, 128>}]} {
    %c0 = arith.constant 0 : index
    %c0_0 = arith.constant 0 : index
    %0 = vector.load %arg1[%c0, %c0_0] : memref<8x1xi32, #tpu.memory_space<vmem>>, vector<8x1xi32>
    %1 = tpu.iota {dimensions = array<i32: 1>} : vector<8x256xi32>
    %2 = vector.broadcast %0 : vector<8x1xi32> to vector<8x256xi32>
    %3 = arith.cmpi eq, %2, %1 : vector<8x256xi32>
    %4 = arith.extui %3 : vector<8x256xi1> to vector<8x256xi32>
    %5 = arith.sitofp %4 : vector<8x256xi32> to vector<8x256xf32>
    %c0_1 = arith.constant 0 : index
    %c0_2 = arith.constant 0 : index
    %6 = vector.load %arg2[%c0_1, %c0_2] : memref<256x128xf32, #tpu.memory_space<vmem>>, vector<256x128xf32>
    %cst = arith.constant dense<0.000000e+00> : vector<8x128xf32>
    %7 = tpu.matmul %5, %6, %cst {dimension_numbers = #tpu.dot_dimension_numbers<[1], [0], [0], [1], [0, 0, 1, 1], [], []>} : vector<8x256xf32>, vector<256x128xf32>, vector<8x128xf32> -> vector<8x128xf32>
    %c0_3 = arith.constant 0 : index
    %c0_4 = arith.constant 0 : index
    %8 = vector.load %arg3[%c0_3, %c0_4] : memref<8x128xf32, #tpu.memory_space<vmem>>, vector<8x128xf32>
    tpu.vector_store %arg3[%c0_3, %c0_4], %7 {strides = array<i32>} : memref<8x128xf32, #tpu.memory_space<vmem>>, vector<8x128xf32>,
    return
  }
  func.func @transform_0(%arg0: i32) -> (i32, i32) {
    %c0_i32 = arith.constant 0 : i32
    %c0_i32_0 = arith.constant 0 : i32
    return %arg0, %c0_i32 : i32, i32
  }
  func.func @transform_1(%arg0: i32) -> (i32, i32) {
    %c0_i32 = arith.constant 0 : i32
    %c0_i32_0 = arith.constant 0 : i32
    %c0_i32_1 = arith.constant 0 : i32
    return %c0_i32, %c0_i32_0 : i32, i32
  }
  func.func @transform_2(%arg0: i32) -> (i32, i32) {
    %c0_i32 = arith.constant 0 : i32
    %c0_i32_0 = arith.constant 0 : i32
    return %arg0, %c0_i32 : i32, i32
  }
}

</mosaic_0001>

<llo_original>
// kernel: tpu_custom_call.1
$region0: #{tpu_custom_call.1}
  #allocation0 [shape = 'u32[]', space=smem, size = 0x4, offset = 0x4, fixed_abs, tag = 'smem constant byte address 0x4 - core index']
  #allocation1 [shape = 'u32[144,128]{1,0:T(1,128)}', space=vmem, size = 0x12000, scoped, tag = 'internal scratch']
  %s0 = inlined_call_operand.vmem [shape: s32[16,1], index: 0, kind: input, shape index: {}]
  %s1 = inlined_call_operand.hbm [shape: f32[256,128], index: 1, kind: input, shape index: {}]
  %s2 = inlined_call_operand.hbm [shape: f32[16,128], index: 2, kind: output, shape index: {}]
  %s3 = sld [smem:[#allocation0]]
  $region45: #{tpu_custom_call.1} parent=0
    _
  %s5 = ssub.s32 1, %s3
  %s6 = scalar_select 0, %s5, %s3
  $region1: #{tpu_custom_call.1} parent=0
    #allocation2 [shape = 'u8[131072]{0}', space=vmem, size = 0x20000, scoped, tag = 'input window, operand 1, single buffered']
    #allocation3 [shape = 's32[2]{0}', space=sflag, size = 0x8, scoped, tag = 'scoped memory for tpu_custom_call.1']
    #allocation4 [shape = 's32[2]{0}', space=sflag, size = 0x8, scoped, tag = 'scoped memory for tpu_custom_call.1']
    #allocation5 [shape = 'u8[8192]{0}', space=vmem, size = 0x2000, scoped, tag = 'output window, operand 0']
    %7 = vsyncpa [#allocation3], 0
    %8 = vsyncpa [#allocation4], 0
    %s9 = scalar_lea.sflag [#allocation4], 1
    %10 = vsyncpa %s9, 0
    loop: start=0, step=1, limit=4
    $region2: #{tpu_custom_call.1} parent=1 // loop_pre_header
      _
    $region3: #{tpu_custom_call.1} parent=1 // loop_header
      %s12 = sphi 0, %s16
      %p13 = scmp.ge.s32.totalorder %s12, 4
      %s22 = sphi 0, %s24
      %s25 = sphi 0, %s22
      %s26 = sphi 0, %s25
      %s42 = sphi 0, %s26
      %s46 = sphi 0, %s46
      %s48 = sphi 0, %s46
      %s49 = sphi 0, %s48
      %s63 = sphi 0, %s49
      %s69 = sphi 0, %s71
      %s72 = sphi 0, %s69
      %s73 = sphi 0, %s72
      %s89 = sphi 0, %s73
    $region4: #{tpu_custom_call.1} parent=1 // loop_header_branch
      %15 = sbr.rel (%p13) target = $region8
    $region5: #{tpu_custom_call.1} parent=1 // loop_body
      %s17 = ssub.s32 %s12, 1
      %s18 = ssub.s32 %s12, 2
      %s19 = sadd.s32 %s12, 1
      %s20 = ssub.s32 %s12, %s19
      %p21 = scmp.eq.s32.totalorder %s20, 0
      %s23 = sadd.s32 %s22, 1
      %s24 = scalar_select %p21, %s22, %s23
      %p27 = pneg %p21
      %p28 = scmp.eq.s32.totalorder %s12, 1
      %p29 = por %p27, %p28
      %p30 = scmp.ne.s32.totalorder %s22, %s25
      %p31 = scmp.eq.s32.totalorder %s12, 0
      %p32 = por %p30, %p31
      %p33 = scmp.ne.s32.totalorder %s22, %s25
      %p34 = scmp.eq.s32.totalorder %s17, 1
      %p35 = por %p33, %p34
      %p36 = scmp.ne.s32.totalorder %s25, %s26
      %p37 = scmp.eq.s32.totalorder %s17, 0
      %p38 = por %p36, %p37
      %p39 = scmp.ne.s32.totalorder %s25, %s26
      %p40 = scmp.eq.s32.totalorder %s18, 1
      %p41 = por %p39, %p40
      %p43 = scmp.ne.s32.totalorder %s26, %s42
      %p44 = scmp.eq.s32.totalorder %s18, 0
      %p45 = por %p43, %p44
      %s47 = sadd.s32 %s46, 1
      %p50 = scmp.eq.s32.totalorder %s12, 1
      %p51 = scmp.ne.s32.totalorder %s46, %s48
      %p52 = scmp.eq.s32.totalorder %s12, 0
      %p53 = por %p51, %p52
      %p54 = scmp.ne.s32.totalorder %s46, %s48
      %p55 = scmp.eq.s32.totalorder %s17, 1
      %p56 = por %p54, %p55
      %p57 = scmp.ne.s32.totalorder %s48, %s49
      %p58 = scmp.eq.s32.totalorder %s17, 0
      %p59 = por %p57, %p58
      %p60 = scmp.ne.s32.totalorder %s48, %s49
      %p61 = scmp.eq.s32.totalorder %s18, 1
      %p62 = por %p60, %p61
      %p64 = scmp.ne.s32.totalorder %s49, %s63
      %p65 = scmp.eq.s32.totalorder %s18, 0
      %p66 = por %p64, %p65
      %s67 = ssub.s32 %s12, %s19
      %p68 = scmp.eq.s32.totalorder %s67, 0
      %s70 = sadd.s32 %s69, 1
      %s71 = scalar_select %p68, %s69, %s70
      %p74 = pneg %p68
      %p75 = scmp.eq.s32.totalorder %s12, 1
      %p76 = por %p74, %p75
      %p77 = scmp.ne.s32.totalorder %s69, %s72
      %p78 = scmp.eq.s32.totalorder %s12, 0
      %p79 = por %p77, %p78
      %p80 = scmp.ne.s32.totalorder %s69, %s72
      %p81 = scmp.eq.s32.totalorder %s17, 1
      %p82 = por %p80, %p81
      %p83 = scmp.ne.s32.totalorder %s72, %s73
      %p84 = scmp.eq.s32.totalorder %s17, 0
      %p85 = por %p83, %p84
      %p86 = scmp.ne.s32.totalorder %s72, %s73
      %p87 = scmp.eq.s32.totalorder %s18, 1
      %p88 = por %p86, %p87
      %p90 = scmp.ne.s32.totalorder %s73, %s89
      %p91 = scmp.eq.s32.totalorder %s18, 0
      %p92 = por %p90, %p91
      %p93 = scmp.le.s32.totalorder 1, %s12
      %p94 = scmp.lt.s32.totalorder %s12, 3
      %p95 = pnand %p93, %p94
      %p96 = pneg %p95
      // Predicated region
      $region9: #{tpu_custom_call.1} parent=5 // pred_check
        _
      $region10: #{tpu_custom_call.1} parent=5 // pred_check_branch
        %98 = sbr.rel (%p95) target = $region12
      $region11: #{tpu_custom_call.1} parent=5 // pred_region
        %s99 = ssub.s32 %s12, 1
        // Predicated region
        $region13: #{tpu_custom_call.1} parent=11 // pred_check
          %p100 = pneg %p59
        $region14: #{tpu_custom_call.1} parent=11 // pred_check_branch
          %102 = sbr.rel (%p100) target = $region16
        $region15: #{tpu_custom_call.1} parent=11 // pred_region
          %s104 = ssub.s32 4096, 4096
          %105 = vsyncadd [#allocation3], %s104
          %s106 = sshll.u32 [#allocation2], 4
          %s107 = int_to_ptr.vmem [resolvable:$true] %s106
          %112 = dma.hbm_to_vmem [thread:$0]  %s1, 4096, %s107, [#allocation3], 128, 128, 8
        $region16: #{tpu_custom_call.1} parent=11 // pred_fallthru
          _
      $region12: #{tpu_custom_call.1} parent=5 // pred_fallthru
        _
      %p113 = scmp.lt.s32.totalorder %s12, 2
      // Predicated region
      $region17: #{tpu_custom_call.1} parent=5 // pred_check
        %p114 = pneg %p113
      $region18: #{tpu_custom_call.1} parent=5 // pred_check_branch
        %116 = sbr.rel (%p114) target = $region20
      $region19: #{tpu_custom_call.1} parent=5 // pred_region
        // Predicated region
        $region21: #{tpu_custom_call.1} parent=19 // pred_check
          %p117 = pneg %p32
        $region22: #{tpu_custom_call.1} parent=19 // pred_check_branch
          %119 = sbr.rel (%p117) target = $region24
        $region23: #{tpu_custom_call.1} parent=19 // pred_region
          %p120 = scmp.lt.s32.totalorder %s12, 1
          %s121 = scalar_select %p120, %s12, 1
          %s122 = smul.addr %s121, 8
          %s123 = scalar_lea.vmem %s0, %s122
        $region24: #{tpu_custom_call.1} parent=19 // pred_fallthru
          _
      $region20: #{tpu_custom_call.1} parent=5 // pred_fallthru
        _
      %p124 = scmp.le.s32.totalorder 1, %s12
      %p125 = scmp.lt.s32.totalorder %s12, 3
      %p126 = pnand %p124, %p125
      %p127 = pneg %p126
      // Predicated region
      $region25: #{tpu_custom_call.1} parent=5 // pred_check
        _
      $region26: #{tpu_custom_call.1} parent=5 // pred_check_branch
        %129 = sbr.rel (%p126) target = $region28
      $region27: #{tpu_custom_call.1} parent=5 // pred_region
        %s130 = ssub.s32 %s12, 1
        // Predicated region
        $region29: #{tpu_custom_call.1} parent=27 // pred_check
          %p131 = pneg %p59
        $region30: #{tpu_custom_call.1} parent=27 // pred_check_branch
          %133 = sbr.rel (%p131) target = $region32
        $region31: #{tpu_custom_call.1} parent=27 // pred_region
          %134 = dma.done [#allocation3], 4096
        $region32: #{tpu_custom_call.1} parent=27 // pred_fallthru
          _
        %p135 = scmp.lt.s32.totalorder %s17, 1
        %s136 = scalar_select %p135, %s17, 1
        %s137 = smul.addr %s136, 8
        %s138 = scalar_lea.vmem %s0, %s137
        %p139 = pneg %p38
        %p140 = pneg %p35
        %p141 = pneg %p59
        %p142 = pneg %p56
        %p143 = pneg %p85
        %p144 = pneg %p82
        %s145 = sand.u32 %s72, 1
        %s146 = scalar_lea.sflag [#allocation4], %s145
        %s147 = sand.u32 %s72, 1
        %s148 = smul.addr %s147, 8
        %s149 = scalar_lea.vmem [#allocation5], %s148
        %p150 = scmp.lt.s32.totalorder %s17, 1
        %s151 = scalar_select %p150, %s17, 1
        %s152 = smul.addr %s151, 8
        %s153 = scalar_lea.vmem %s0, %s152
        %v154 = vld [vmem:[%s153] sm:$0xff]
        %v155 = vlaneseq
        %v156 = vand.u32 %v155, 127
        %v157 = vadd.s32 %v156, 128
        %158 = vset.pattern.permute.xlu0 0
        %159 = vperm.xlu0 %158, %v154
        %v160 = vpop.permute.xlu0 %159
        %vm161 = vcmp.eq.s32.totalorder %v160, %v156
        %vm162 = vcmp.eq.s32.totalorder %v160, %v157
        %v163 = vsel %vm161, 1, 0
        %v164 = vsel %vm162, 1, 0
        %v165 = vcvt.s32.f32 %v163
        %v166 = vcvt.s32.f32 %v164
        %v167 = vld [vmem:[#allocation2] sm:$0xff]
        %v168 = vld [vmem:[#allocation2 + $0x8] sm:$0xff]
        %v169 = vld [vmem:[#allocation2 + $0x10] sm:$0xff]
        %v170 = vld [vmem:[#allocation2 + $0x18] sm:$0xff]
        %v171 = vld [vmem:[#allocation2 + $0x20] sm:$0xff]
        %v172 = vld [vmem:[#allocation2 + $0x28] sm:$0xff]
        %v173 = vld [vmem:[#allocation2 + $0x30] sm:$0xff]
        %v174 = vld [vmem:[#allocation2 + $0x38] sm:$0xff]
        %v175 = vld [vmem:[#allocation2 + $0x40] sm:$0xff]
        %v176 = vld [vmem:[#allocation2 + $0x48] sm:$0xff]
        %v177 = vld [vmem:[#allocation2 + $0x50] sm:$0xff]
        %v178 = vld [vmem:[#allocation2 + $0x58] sm:$0xff]
        %v179 = vld [vmem:[#allocation2 + $0x60] sm:$0xff]
        %v180 = vld [vmem:[#allocation2 + $0x68] sm:$0xff]
        %v181 = vld [vmem:[#allocation2 + $0x70] sm:$0xff]
        %v182 = vld [vmem:[#allocation2 + $0x78] sm:$0xff]
        %v183 = vld [vmem:[#allocation2 + $0x80] sm:$0xff]
        %v184 = vld [vmem:[#allocation2 + $0x88] sm:$0xff]
        %v185 = vld [vmem:[#allocation2 + $0x90] sm:$0xff]
        %v186 = vld [vmem:[#allocation2 + $0x98] sm:$0xff]
        %v187 = vld [vmem:[#allocation2 + $0xa0] sm:$0xff]
        %v188 = vld [vmem:[#allocation2 + $0xa8] sm:$0xff]
        %v189 = vld [vmem:[#allocation2 + $0xb0] sm:$0xff]
        %v190 = vld [vmem:[#allocation2 + $0xb8] sm:$0xff]
        %v191 = vld [vmem:[#allocation2 + $0xc0] sm:$0xff]
        %v192 = vld [vmem:[#allocation2 + $0xc8] sm:$0xff]
        %v193 = vld [vmem:[#allocation2 + $0xd0] sm:$0xff]
        %v194 = vld [vmem:[#allocation2 + $0xd8] sm:$0xff]
        %v195 = vld [vmem:[#allocation2 + $0xe0] sm:$0xff]
        %v196 = vld [vmem:[#allocation2 + $0xe8] sm:$0xff]
        %v197 = vld [vmem:[#allocation2 + $0xf0] sm:$0xff]
        %v198 = vld [vmem:[#allocation2 + $0xf8] sm:$0xff]
        %199 = vmatprep.subr.mxu0 0.0
        %200 = vmatpush1.msra.mxu0 %v167
        %201 = vmatprep.subr.mxu0 0.0
        %202 = vmatpush1.msra.mxu0 %v168
        %203 = vmatprep.subr.mxu0 0.0
        %204 = vmatpush1.msra.mxu0 %v169
        %205 = vmatprep.subr.mxu0 0.0
        %206 = vmatpush1.msra.mxu0 %v170
        %207 = vmatprep.subr.mxu0 0.0
        %208 = vmatpush1.msra.mxu0 %v171
        %209 = vmatprep.subr.mxu0 0.0
        %210 = vmatpush1.msra.mxu0 %v172
        %211 = vmatprep.subr.mxu0 0.0
        %212 = vmatpush1.msra.mxu0 %v173
        %213 = vmatprep.subr.mxu0 0.0
        %214 = vmatpush1.msra.mxu0 %v174
        %215 = vmatprep.subr.mxu0 0.0
        %216 = vmatpush1.msra.mxu0 %v175
        %217 = vmatprep.subr.mxu0 0.0
        %218 = vmatpush1.msra.mxu0 %v176
        %219 = vmatprep.subr.mxu0 0.0
        %220 = vmatpush1.msra.mxu0 %v177
        %221 = vmatprep.subr.mxu0 0.0
        %222 = vmatpush1.msra.mxu0 %v178
        %223 = vmatprep.subr.mxu0 0.0
        %224 = vmatpush1.msra.mxu0 %v179
        %225 = vmatprep.subr.mxu0 0.0
        %226 = vmatpush1.msra.mxu0 %v180
        %227 = vmatprep.subr.mxu0 0.0
        %228 = vmatpush1.msra.mxu0 %v181
        %229 = vmatprep.subr.mxu0 0.0
        %230 = vmatpush1.msra.mxu0 %v182
        %231 = vmatprep.subr.mxu0 0.0
        %232 = vmatpush1.msra.mxu0 %v183
        %233 = vmatprep.subr.mxu0 0.0
        %234 = vmatpush1.msra.mxu0 %v184
        %235 = vmatprep.subr.mxu0 0.0
        %236 = vmatpush1.msra.mxu0 %v185
        %237 = vmatprep.subr.mxu0 0.0
        %238 = vmatpush1.msra.mxu0 %v186
        %239 = vmatprep.subr.mxu0 0.0
        %240 = vmatpush1.msra.mxu0 %v187
        %241 = vmatprep.subr.mxu0 0.0
        %242 = vmatpush1.msra.mxu0 %v188
        %243 = vmatprep.subr.mxu0 0.0
        %244 = vmatpush1.msra.mxu0 %v189
        %245 = vmatprep.subr.mxu0 0.0
        %246 = vmatpush1.msra.mxu0 %v190
        %247 = vmatprep.subr.mxu0 0.0
        %248 = vmatpush1.msra.mxu0 %v191
        %249 = vmatprep.subr.mxu0 0.0
        %250 = vmatpush1.msra.mxu0 %v192
        %251 = vmatprep.subr.mxu0 0.0
        %252 = vmatpush1.msra.mxu0 %v193
        %253 = vmatprep.subr.mxu0 0.0
        %254 = vmatpush1.msra.mxu0 %v194
        %255 = vmatprep.subr.mxu0 0.0
        %256 = vmatpush1.msra.mxu0 %v195
        %257 = vmatprep.subr.mxu0 0.0
        %258 = vmatpush1.msra.mxu0 %v196
        %259 = vmatprep.subr.mxu0 0.0
        %260 = vmatpush1.msra.mxu0 %v197
        %261 = vmatprep.subr.mxu0 0.0
        %262 = vmatpush1.msra.mxu0 %v198
        %263 = vmatprep.mubr.f32.mxu0 %v166
        %264 = vmatmul.mubr.f32.gmra.mrb[0].mxu0 %v165
        %v265 = vpop.f32.mrb[0].mxu0
        %v266 = vadd.f32 0.0, %v265
        %v267 = vpop.f32.mrb[0].mxu0
        %268 = vdwg.mxu0
        %269 = vst [vmem:[%s149] sm:$0xff] %v266
        %s270 = sand.u32 %s72, 1
        %s271 = scalar_lea.sflag [#allocation4], %s270
        %s272 = sand.u32 %s72, 1
        %s273 = smul.addr %s272, 8
        %s274 = scalar_lea.vmem [#allocation5], %s273
        // Predicated region
        $region33: #{tpu_custom_call.1} parent=27 // pred_check
          %p275 = pneg %p82
        $region34: #{tpu_custom_call.1} parent=27 // pred_check_branch
          %277 = sbr.rel (%p275) target = $region36
        $region35: #{tpu_custom_call.1} parent=27 // pred_region
          %s279 = ssub.s32 128, 128
          %280 = vsyncadd %s271, %s279
          %s281 = smul.addr %s17, 128
          %s282 = scalar_lea.hbm %s2, %s281
          %s284 = sshll.u32 %s274, 4
          %s285 = int_to_ptr.vmem [resolvable:$true] %s284
          %287 = dma.vmem_to_hbm [thread:$0]  %s285, 128, %s282, %s271
        $region36: #{tpu_custom_call.1} parent=27 // pred_fallthru
          _
      $region28: #{tpu_custom_call.1} parent=5 // pred_fallthru
        _
      %p288 = scmp.le.s32.totalorder 2, %s12
      // Predicated region
      $region37: #{tpu_custom_call.1} parent=5 // pred_check
        %p289 = pneg %p288
      $region38: #{tpu_custom_call.1} parent=5 // pred_check_branch
        %291 = sbr.rel (%p289) target = $region40
      $region39: #{tpu_custom_call.1} parent=5 // pred_region
        %s292 = ssub.s32 %s12, 2
        // Predicated region
        $region41: #{tpu_custom_call.1} parent=39 // pred_check
          %p293 = pneg %p88
        $region42: #{tpu_custom_call.1} parent=39 // pred_check_branch
          %295 = sbr.rel (%p293) target = $region44
        $region43: #{tpu_custom_call.1} parent=39 // pred_region
          %s296 = sand.u32 %s73, 1
          %s297 = scalar_lea.sflag [#allocation4], %s296
          %s298 = sand.u32 %s73, 1
          %s299 = smul.addr %s298, 8
          %s300 = scalar_lea.vmem [#allocation5], %s299
          %301 = dma.done %s297, 128
        $region44: #{tpu_custom_call.1} parent=39 // pred_fallthru
          _
      $region40: #{tpu_custom_call.1} parent=5 // pred_fallthru
        _
    $region6: #{tpu_custom_call.1} parent=1 // loop_footer
      %s16 = sadd.s32 1, %s12
    $region7: #{tpu_custom_call.1} parent=1 // loop_footer_branch
      %11 = sbr.rel target = $region3
    $region8: #{tpu_custom_call.1} parent=1 // loop_exit
      _
    %302 = vsyncpa [#allocation3], 1
    %s303 = scalar_lea.sflag [#allocation3], 1
    %304 = vsyncpa %s303, 1
    %305 = vsyncpa [#allocation4], 1
    %s306 = scalar_lea.sflag [#allocation4], 1
    %307 = vsyncpa %s306, 1

</llo_original>
